<compile_context>
chip_gen: v6e
topology: v6e:2x2x1
jax: 0.10.0
libtpu: 0.0.40
codegen_flags: <defaults>
</compile_context>

<pallas_src>
import functools

import jax
import jax.numpy as jnp
from jax import lax
from jax.experimental import pallas as pl
from jax.experimental.pallas import tpu as pltpu


def _recur_and_head(pre, whh_ref, wout_ref, bout_ref, out_ref,
                    *, batch, batch_pad, seq):
    """Shared recurrence + linear head. `pre` is (seq*batch_pad, H), time-major."""
    H = whh_ref.shape[0]
    whh = whh_ref[...]                                    # (H, H), loaded once
    h = jnp.zeros((batch_pad, H), jnp.float32)
    # Fully unrolled (seq tiny & static); slices are static and 8-sublane aligned.
    for t in range(seq):
        h = jnp.tanh(pre[t * batch_pad:(t + 1) * batch_pad, :]
                     + jnp.dot(h, whh, preferred_element_type=jnp.float32))
    logits = (jnp.dot(h, wout_ref[...], preferred_element_type=jnp.float32)
              + bout_ref[...])                            # (batch_pad, V)
    # Drop padded rows only here, at the final store (V<128 -> masked vst, noise).
    out_ref[...] = logits[:batch, :].astype(out_ref.dtype)


def _textrnn_tok_kernel(tok_ref, wih_ref, whh_ref, brnn_ref, wout_ref, bout_ref,
                        out_ref, *, batch, batch_pad, seq):
    # tok_ref : (B, T) int32 in SMEM  (token ids; model input is one_hot(tokens))
    # wih_ref : (C, H)   whh_ref: (H, H)   brnn_ref: (1, H)  (= b_ih + b_hh)
    # wout_ref: (H, V)   bout_ref: (1, V)  out_ref : (B, V)
    B, Bp, T = batch, batch_pad, seq
    C = wih_ref.shape[0]
    rows = T * Bp

    # --- Prologue (entirely off the serial chain): build the time-major one-hot
    # from SMEM token ids, then ONE MXU pass for the whole input projection.
    r_iota = lax.broadcasted_iota(jnp.int32, (rows, 1), 0)
    tok_col = jnp.full((rows, 1), -1, jnp.int32)          # -1 => all-zero padded row
    for t in range(T):
        for b in range(B):
            tok_col = jnp.where(r_iota == (t * Bp + b), tok_ref[b, t], tok_col)
    cls_iota = lax.broadcasted_iota(jnp.int32, (rows, C), 1)
    onehot = (cls_iota == tok_col).astype(jnp.float32)    # (T*Bp, C)
    pre = (jnp.dot(onehot, wih_ref[...], preferred_element_type=jnp.float32)
           + brnn_ref[...])                               # (T*Bp, H)

    _recur_and_head(pre, whh_ref, wout_ref, bout_ref, out_ref,
                    batch=B, batch_pad=Bp, seq=T)


def _textrnn_dense_kernel(x_ref, wih_ref, whh_ref, brnn_ref, wout_ref, bout_ref,
                          out_ref, *, batch, batch_pad, seq):
    # x_ref: (T*Bp, C) time-major, batch padded to Bp: row t*Bp + b == x[t, b, :]
    pre = (jnp.dot(x_ref[...], wih_ref[...], preferred_element_type=jnp.float32)
           + brnn_ref[...])                               # (T*Bp, H)
    _recur_and_head(pre, whh_ref, wout_ref, bout_ref, out_ref,
                    batch=batch, batch_pad=batch_pad, seq=seq)


def _pad_batch(n):
    return max(8, -(-n // 8) * 8)


def textrnn_forward_tokens(tokens, w_ih, w_hh, b_rnn, w_out, b_out):
    """Fused fast path: tokens (B, T) int32; semantics == forward(one_hot(tokens))."""
    B, T = tokens.shape
    V = w_out.shape[1]
    Bp = _pad_batch(B)

    smem = pl.BlockSpec(memory_space=pltpu.MemorySpace.SMEM)
    vmem = pl.BlockSpec(memory_space=pltpu.MemorySpace.VMEM)

    return pl.pallas_call(
        functools.partial(_textrnn_tok_kernel, batch=B, batch_pad=Bp, seq=T),
        out_shape=jax.ShapeDtypeStruct((B, V), jnp.float32),
        in_specs=[smem, vmem, vmem, vmem, vmem, vmem],
        out_specs=vmem,
    )(tokens.astype(jnp.int32), w_ih, w_hh, b_rnn, w_out, b_out)


def textrnn_forward(x, w_ih, w_hh, b_rnn, w_out, b_out):
    """General path (keeps original module signature): x (B, T, C) float."""
    B, T, C = x.shape
    V = w_out.shape[1]
    Bp = _pad_batch(B)

    # torch.transpose(x, 0, 1) -> time-major; pad batch to 8 sublanes; flatten.
    x_tm = jnp.transpose(x, (1, 0, 2)).astype(jnp.float32)        # (T, B, C)
    if Bp != B:
        x_tm = jnp.concatenate(
            [x_tm, jnp.zeros((T, Bp - B, C), jnp.float32)], axis=1)
    x_flat = x_tm.reshape(T * Bp, C)

    vmem = pl.BlockSpec(memory_space=pltpu.MemorySpace.VMEM)
    return pl.pallas_call(
        functools.partial(_textrnn_dense_kernel, batch=B, batch_pad=Bp, seq=T),
        out_shape=jax.ShapeDtypeStruct((B, V), jnp.float32),
        in_specs=[vmem] * 6,
        out_specs=vmem,
    )(x_flat, w_ih, w_hh, b_rnn, w_out, b_out)


def textrnn_reference(x, w_ih, w_hh, b_rnn, w_out, b_out):
    """Pure-JAX reference matching torch.nn.RNN(tanh) + Linear."""
    x_tm = jnp.transpose(x, (1, 0, 2)).astype(jnp.float32)  # (T, B, C)
    B = x.shape[0]
    H = w_hh.shape[0]
    h = jnp.zeros((B, H), jnp.float32)
    for t in range(x_tm.shape[0]):
        h = jnp.tanh(x_tm[t] @ w_ih + h @ w_hh + b_rnn)
    return h @ w_out + b_out


if __name__ == "__main__":
    # Small shapes implied by the module: one-hot vocab inputs, RNN hidden, vocab logits.
    batch, seq, n_class, n_hidden = 2, 8, 16, 32

    key = jax.random.PRNGKey(0)
    kx, k1, k2, k3, k4, k5, k6 = jax.random.split(key, 7)

    # Token ids; the original model feeds one-hot word vectors of these.
    tokens = jax.random.randint(kx, (batch, seq), 0, n_class, dtype=jnp.int32)
    x = jax.nn.one_hot(tokens, n_class, dtype=jnp.float32)   # (B, T, C) for ref/dense path

    # PyTorch-style uniform(-1/sqrt(H), 1/sqrt(H)) init, stored as (in, out).
    s = 1.0 / jnp.sqrt(jnp.float32(n_hidden))
    w_ih = jax.random.uniform(k1, (n_class, n_hidden), jnp.float32, -s, s)
    w_hh = jax.random.uniform(k2, (n_hidden, n_hidden), jnp.float32, -s, s)
    b_ih = jax.random.uniform(k3, (1, n_hidden), jnp.float32, -s, s)
    b_hh = jax.random.uniform(k4, (1, n_hidden), jnp.float32, -s, s)
    b_rnn = b_ih + b_hh  # RNN adds both biases; fold into one
    w_out = jax.random.uniform(k5, (n_hidden, n_class), jnp.float32, -s, s)
    b_out = jax.random.uniform(k6, (1, n_class), jnp.float32, -s, s)

    ref = textrnn_reference(x, w_ih, w_hh, b_rnn, w_out, b_out)

    out_tok = jax.block_until_ready(
        textrnn_forward_tokens(tokens, w_ih, w_hh, b_rnn, w_out, b_out))
    out_dense = jax.block_until_ready(
        textrnn_forward(x, w_ih, w_hh, b_rnn, w_out, b_out))

    assert out_tok.shape == (batch, n_class)
    assert out_dense.shape == (batch, n_class)
    assert jnp.allclose(out_tok, ref, atol=1e-5, rtol=1e-5), "token-path mismatch"
    assert jnp.allclose(out_dense, ref, atol=1e-5, rtol=1e-5), "dense-path mismatch"

    print("KERNEL_OK")
</pallas_src>

<mosaic_0001>
module attributes {stable_mosaic.version = 11 : i64} {
  func.func @_textrnn_tok_kernel(%arg0: memref<2x8xi32, #tpu.memory_space<smem>>, %arg1: memref<16x32xf32, #tpu.memory_space<vmem>>, %arg2: memref<32x32xf32, #tpu.memory_space<vmem>>, %arg3: memref<1x32xf32, #tpu.memory_space<vmem>>, %arg4: memref<32x16xf32, #tpu.memory_space<vmem>>, %arg5: memref<1x16xf32, #tpu.memory_space<vmem>>, %arg6: memref<2x16xf32, #tpu.memory_space<vmem>>) attributes {dimension_semantics = [], scalar_prefetch = 0 : i64, scratch_operands = 0 : i64, tpu.core_type = #tpu.core_type<tc>} {
    %0 = tpu.iota {dimensions = array<i32: 0>} : vector<64x1xi32>
    %c-1_i32 = arith.constant -1 : i32
    %1 = vector.broadcast %c-1_i32 : i32 to vector<64x1xi32>
    %c0_i32 = arith.constant 0 : i32
    %2 = vector.broadcast %c0_i32 : i32 to vector<64x1xi32>
    %3 = arith.cmpi eq, %0, %2 : vector<64x1xi32>
    %c0 = arith.constant 0 : index
    %c0_0 = arith.constant 0 : index
    %4 = memref.load %arg0[%c0, %c0_0] : memref<2x8xi32, #tpu.memory_space<smem>>
    %5 = vector.broadcast %4 : i32 to vector<64x1xi32>
    %6 = arith.select %3, %5, %1 : vector<64x1xi1>, vector<64x1xi32>
    %c1_i32 = arith.constant 1 : i32
    %7 = vector.broadcast %c1_i32 : i32 to vector<64x1xi32>
    %8 = arith.cmpi eq, %0, %7 : vector<64x1xi32>
    %c1 = arith.constant 1 : index
    %c0_1 = arith.constant 0 : index
    %9 = memref.load %arg0[%c1, %c0_1] : memref<2x8xi32, #tpu.memory_space<smem>>
    %10 = vector.broadcast %9 : i32 to vector<64x1xi32>
    %11 = arith.select %8, %10, %6 : vector<64x1xi1>, vector<64x1xi32>
    %c8_i32 = arith.constant 8 : i32
    %12 = vector.broadcast %c8_i32 : i32 to vector<64x1xi32>
    %13 = arith.cmpi eq, %0, %12 : vector<64x1xi32>
    %c0_2 = arith.constant 0 : index
    %c1_3 = arith.constant 1 : index
    %14 = memref.load %arg0[%c0_2, %c1_3] : memref<2x8xi32, #tpu.memory_space<smem>>
    %15 = vector.broadcast %14 : i32 to vector<64x1xi32>
    %16 = arith.select %13, %15, %11 : vector<64x1xi1>, vector<64x1xi32>
    %c9_i32 = arith.constant 9 : i32
    %17 = vector.broadcast %c9_i32 : i32 to vector<64x1xi32>
    %18 = arith.cmpi eq, %0, %17 : vector<64x1xi32>
    %c1_4 = arith.constant 1 : index
    %c1_5 = arith.constant 1 : index
    %19 = memref.load %arg0[%c1_4, %c1_5] : memref<2x8xi32, #tpu.memory_space<smem>>
    %20 = vector.broadcast %19 : i32 to vector<64x1xi32>
    %21 = arith.select %18, %20, %16 : vector<64x1xi1>, vector<64x1xi32>
    %c16_i32 = arith.constant 16 : i32
    %22 = vector.broadcast %c16_i32 : i32 to vector<64x1xi32>
    %23 = arith.cmpi eq, %0, %22 : vector<64x1xi32>
    %c0_6 = arith.constant 0 : index
    %c2 = arith.constant 2 : index
    %24 = memref.load %arg0[%c0_6, %c2] : memref<2x8xi32, #tpu.memory_space<smem>>
    %25 = vector.broadcast %24 : i32 to vector<64x1xi32>
    %26 = arith.select %23, %25, %21 : vector<64x1xi1>, vector<64x1xi32>
    %c17_i32 = arith.constant 17 : i32
    %27 = vector.broadcast %c17_i32 : i32 to vector<64x1xi32>
    %28 = arith.cmpi eq, %0, %27 : vector<64x1xi32>
    %c1_7 = arith.constant 1 : index
    %c2_8 = arith.constant 2 : index
    %29 = memref.load %arg0[%c1_7, %c2_8] : memref<2x8xi32, #tpu.memory_space<smem>>
    %30 = vector.broadcast %29 : i32 to vector<64x1xi32>
    %31 = arith.select %28, %30, %26 : vector<64x1xi1>, vector<64x1xi32>
    %c24_i32 = arith.constant 24 : i32
    %32 = vector.broadcast %c24_i32 : i32 to vector<64x1xi32>
    %33 = arith.cmpi eq, %0, %32 : vector<64x1xi32>
    %c0_9 = arith.constant 0 : index
    %c3 = arith.constant 3 : index
    %34 = memref.load %arg0[%c0_9, %c3] : memref<2x8xi32, #tpu.memory_space<smem>>
    %35 = vector.broadcast %34 : i32 to vector<64x1xi32>
    %36 = arith.select %33, %35, %31 : vector<64x1xi1>, vector<64x1xi32>
    %c25_i32 = arith.constant 25 : i32
    %37 = vector.broadcast %c25_i32 : i32 to vector<64x1xi32>
    %38 = arith.cmpi eq, %0, %37 : vector<64x1xi32>
    %c1_10 = arith.constant 1 : index
    %c3_11 = arith.constant 3 : index
    %39 = memref.load %arg0[%c1_10, %c3_11] : memref<2x8xi32, #tpu.memory_space<smem>>
    %40 = vector.broadcast %39 : i32 to vector<64x1xi32>
    %41 = arith.select %38, %40, %36 : vector<64x1xi1>, vector<64x1xi32>
    %c32_i32 = arith.constant 32 : i32
    %42 = vector.broadcast %c32_i32 : i32 to vector<64x1xi32>
    %43 = arith.cmpi eq, %0, %42 : vector<64x1xi32>
    %c0_12 = arith.constant 0 : index
    %c4 = arith.constant 4 : index
    %44 = memref.load %arg0[%c0_12, %c4] : memref<2x8xi32, #tpu.memory_space<smem>>
    %45 = vector.broadcast %44 : i32 to vector<64x1xi32>
    %46 = arith.select %43, %45, %41 : vector<64x1xi1>, vector<64x1xi32>
    %c33_i32 = arith.constant 33 : i32
    %47 = vector.broadcast %c33_i32 : i32 to vector<64x1xi32>
    %48 = arith.cmpi eq, %0, %47 : vector<64x1xi32>
    %c1_13 = arith.constant 1 : index
    %c4_14 = arith.constant 4 : index
    %49 = memref.load %arg0[%c1_13, %c4_14] : memref<2x8xi32, #tpu.memory_space<smem>>
    %50 = vector.broadcast %49 : i32 to vector<64x1xi32>
    %51 = arith.select %48, %50, %46 : vector<64x1xi1>, vector<64x1xi32>
    %c40_i32 = arith.constant 40 : i32
    %52 = vector.broadcast %c40_i32 : i32 to vector<64x1xi32>
    %53 = arith.cmpi eq, %0, %52 : vector<64x1xi32>
    %c0_15 = arith.constant 0 : index
    %c5 = arith.constant 5 : index
    %54 = memref.load %arg0[%c0_15, %c5] : memref<2x8xi32, #tpu.memory_space<smem>>
    %55 = vector.broadcast %54 : i32 to vector<64x1xi32>
    %56 = arith.select %53, %55, %51 : vector<64x1xi1>, vector<64x1xi32>
    %c41_i32 = arith.constant 41 : i32
    %57 = vector.broadcast %c41_i32 : i32 to vector<64x1xi32>
    %58 = arith.cmpi eq, %0, %57 : vector<64x1xi32>
    %c1_16 = arith.constant 1 : index
    %c5_17 = arith.constant 5 : index
    %59 = memref.load %arg0[%c1_16, %c5_17] : memref<2x8xi32, #tpu.memory_space<smem>>
    %60 = vector.broadcast %59 : i32 to vector<64x1xi32>
    %61 = arith.select %58, %60, %56 : vector<64x1xi1>, vector<64x1xi32>
    %c48_i32 = arith.constant 48 : i32
    %62 = vector.broadcast %c48_i32 : i32 to vector<64x1xi32>
    %63 = arith.cmpi eq, %0, %62 : vector<64x1xi32>
    %c0_18 = arith.constant 0 : index
    %c6 = arith.constant 6 : index
    %64 = memref.load %arg0[%c0_18, %c6] : memref<2x8xi32, #tpu.memory_space<smem>>
    %65 = vector.broadcast %64 : i32 to vector<64x1xi32>
    %66 = arith.select %63, %65, %61 : vector<64x1xi1>, vector<64x1xi32>
    %c49_i32 = arith.constant 49 : i32
    %67 = vector.broadcast %c49_i32 : i32 to vector<64x1xi32>
    %68 = arith.cmpi eq, %0, %67 : vector<64x1xi32>
    %c1_19 = arith.constant 1 : index
    %c6_20 = arith.constant 6 : index
    %69 = memref.load %arg0[%c1_19, %c6_20] : memref<2x8xi32, #tpu.memory_space<smem>>
    %70 = vector.broadcast %69 : i32 to vector<64x1xi32>
    %71 = arith.select %68, %70, %66 : vector<64x1xi1>, vector<64x1xi32>
    %c56_i32 = arith.constant 56 : i32
    %72 = vector.broadcast %c56_i32 : i32 to vector<64x1xi32>
    %73 = arith.cmpi eq, %0, %72 : vector<64x1xi32>
    %c0_21 = arith.constant 0 : index
    %c7 = arith.constant 7 : index
    %74 = memref.load %arg0[%c0_21, %c7] : memref<2x8xi32, #tpu.memory_space<smem>>
    %75 = vector.broadcast %74 : i32 to vector<64x1xi32>
    %76 = arith.select %73, %75, %71 : vector<64x1xi1>, vector<64x1xi32>
    %c57_i32 = arith.constant 57 : i32
    %77 = vector.broadcast %c57_i32 : i32 to vector<64x1xi32>
    %78 = arith.cmpi eq, %0, %77 : vector<64x1xi32>
    %c1_22 = arith.constant 1 : index
    %c7_23 = arith.constant 7 : index
    %79 = memref.load %arg0[%c1_22, %c7_23] : memref<2x8xi32, #tpu.memory_space<smem>>
    %80 = vector.broadcast %79 : i32 to vector<64x1xi32>
    %81 = arith.select %78, %80, %76 : vector<64x1xi1>, vector<64x1xi32>
    %82 = tpu.iota {dimensions = array<i32: 1>} : vector<64x16xi32>
    %83 = vector.broadcast %81 : vector<64x1xi32> to vector<64x16xi32>
    %84 = arith.cmpi eq, %82, %83 : vector<64x16xi32>
    %85 = arith.extui %84 : vector<64x16xi1> to vector<64x16xi32>
    %86 = arith.sitofp %85 : vector<64x16xi32> to vector<64x16xf32>
    %c0_24 = arith.constant 0 : index
    %c0_25 = arith.constant 0 : index
    %87 = vector.load %arg1[%c0_24, %c0_25] : memref<16x32xf32, #tpu.memory_space<vmem>>, vector<16x32xf32>
    %cst = arith.constant dense<0.000000e+00> : vector<64x32xf32>
    %88 = tpu.matmul %86, %87, %cst {dimension_numbers = #tpu.dot_dimension_numbers<[1], [0], [0], [1], [0, 0, 1, 1], [], []>} : vector<64x16xf32>, vector<16x32xf32>, vector<64x32xf32> -> vector<64x32xf32>
    %c0_26 = arith.constant 0 : index
    %c0_27 = arith.constant 0 : index
    %89 = vector.load %arg3[%c0_26, %c0_27] : memref<1x32xf32, #tpu.memory_space<vmem>>, vector<1x32xf32>
    %90 = vector.broadcast %89 : vector<1x32xf32> to vector<64x32xf32>
    %91 = arith.addf %88, %90 : vector<64x32xf32>
    %c0_28 = arith.constant 0 : index
    %c0_29 = arith.constant 0 : index
    %92 = vector.load %arg2[%c0_28, %c0_29] : memref<32x32xf32, #tpu.memory_space<vmem>>, vector<32x32xf32>
    %cst_30 = arith.constant 0.000000e+00 : f32
    %93 = vector.broadcast %cst_30 : f32 to vector<8x32xf32>
    %94 = vector.extract_strided_slice %91 {offsets = [0, 0], sizes = [8, 32], strides = [1, 1]} : vector<64x32xf32> to vector<8x32xf32>
    %cst_31 = arith.constant dense<0.000000e+00> : vector<8x32xf32>
    %95 = tpu.matmul %93, %92, %cst_31 {dimension_numbers = #tpu.dot_dimension_numbers<[1], [0], [0], [1], [0, 0, 1, 1], [], []>} : vector<8x32xf32>, vector<32x32xf32>, vector<8x32xf32> -> vector<8x32xf32>
    %96 = arith.addf %94, %95 : vector<8x32xf32>
    %97 = math.tanh %96 : vector<8x32xf32>
    %98 = vector.extract_strided_slice %91 {offsets = [8, 0], sizes = [8, 32], strides = [1, 1]} : vector<64x32xf32> to vector<8x32xf32>
    %cst_32 = arith.constant dense<0.000000e+00> : vector<8x32xf32>
    %99 = tpu.matmul %97, %92, %cst_32 {dimension_numbers = #tpu.dot_dimension_numbers<[1], [0], [0], [1], [0, 0, 1, 1], [], []>} : vector<8x32xf32>, vector<32x32xf32>, vector<8x32xf32> -> vector<8x32xf32>
    %100 = arith.addf %98, %99 : vector<8x32xf32>
    %101 = math.tanh %100 : vector<8x32xf32>
    %102 = vector.extract_strided_slice %91 {offsets = [16, 0], sizes = [8, 32], strides = [1, 1]} : vector<64x32xf32> to vector<8x32xf32>
    %cst_33 = arith.constant dense<0.000000e+00> : vector<8x32xf32>
    %103 = tpu.matmul %101, %92, %cst_33 {dimension_numbers = #tpu.dot_dimension_numbers<[1], [0], [0], [1], [0, 0, 1, 1], [], []>} : vector<8x32xf32>, vector<32x32xf32>, vector<8x32xf32> -> vector<8x32xf32>
    %104 = arith.addf %102, %103 : vector<8x32xf32>
    %105 = math.tanh %104 : vector<8x32xf32>
    %106 = vector.extract_strided_slice %91 {offsets = [24, 0], sizes = [8, 32], strides = [1, 1]} : vector<64x32xf32> to vector<8x32xf32>
    %cst_34 = arith.constant dense<0.000000e+00> : vector<8x32xf32>
    %107 = tpu.matmul %105, %92, %cst_34 {dimension_numbers = #tpu.dot_dimension_numbers<[1], [0], [0], [1], [0, 0, 1, 1], [], []>} : vector<8x32xf32>, vector<32x32xf32>, vector<8x32xf32> -> vector<8x32xf32>
    %108 = arith.addf %106, %107 : vector<8x32xf32>
    %109 = math.tanh %108 : vector<8x32xf32>
    %110 = vector.extract_strided_slice %91 {offsets = [32, 0], sizes = [8, 32], strides = [1, 1]} : vector<64x32xf32> to vector<8x32xf32>
    %cst_35 = arith.constant dense<0.000000e+00> : vector<8x32xf32>
    %111 = tpu.matmul %109, %92, %cst_35 {dimension_numbers = #tpu.dot_dimension_numbers<[1], [0], [0], [1], [0, 0, 1, 1], [], []>} : vector<8x32xf32>, vector<32x32xf32>, vector<8x32xf32> -> vector<8x32xf32>
    %112 = arith.addf %110, %111 : vector<8x32xf32>
    %113 = math.tanh %112 : vector<8x32xf32>
    %114 = vector.extract_strided_slice %91 {offsets = [40, 0], sizes = [8, 32], strides = [1, 1]} : vector<64x32xf32> to vector<8x32xf32>
    %cst_36 = arith.constant dense<0.000000e+00> : vector<8x32xf32>
    %115 = tpu.matmul %113, %92, %cst_36 {dimension_numbers = #tpu.dot_dimension_numbers<[1], [0], [0], [1], [0, 0, 1, 1], [], []>} : vector<8x32xf32>, vector<32x32xf32>, vector<8x32xf32> -> vector<8x32xf32>
    %116 = arith.addf %114, %115 : vector<8x32xf32>
    %117 = math.tanh %116 : vector<8x32xf32>
    %118 = vector.extract_strided_slice %91 {offsets = [48, 0], sizes = [8, 32], strides = [1, 1]} : vector<64x32xf32> to vector<8x32xf32>
    %cst_37 = arith.constant dense<0.000000e+00> : vector<8x32xf32>
    %119 = tpu.matmul %117, %92, %cst_37 {dimension_numbers = #tpu.dot_dimension_numbers<[1], [0], [0], [1], [0, 0, 1, 1], [], []>} : vector<8x32xf32>, vector<32x32xf32>, vector<8x32xf32> -> vector<8x32xf32>
    %120 = arith.addf %118, %119 : vector<8x32xf32>
    %121 = math.tanh %120 : vector<8x32xf32>
    %122 = vector.extract_strided_slice %91 {offsets = [56, 0], sizes = [8, 32], strides = [1, 1]} : vector<64x32xf32> to vector<8x32xf32>
    %cst_38 = arith.constant dense<0.000000e+00> : vector<8x32xf32>
    %123 = tpu.matmul %121, %92, %cst_38 {dimension_numbers = #tpu.dot_dimension_numbers<[1], [0], [0], [1], [0, 0, 1, 1], [], []>} : vector<8x32xf32>, vector<32x32xf32>, vector<8x32xf32> -> vector<8x32xf32>
    %124 = arith.addf %122, %123 : vector<8x32xf32>
    %125 = math.tanh %124 : vector<8x32xf32>
    %c0_39 = arith.constant 0 : index
    %c0_40 = arith.constant 0 : index
    %126 = vector.load %arg4[%c0_39, %c0_40] : memref<32x16xf32, #tpu.memory_space<vmem>>, vector<32x16xf32>
    %cst_41 = arith.constant dense<0.000000e+00> : vector<8x16xf32>
    %127 = tpu.matmul %125, %126, %cst_41 {dimension_numbers = #tpu.dot_dimension_numbers<[1], [0], [0], [1], [0, 0, 1, 1], [], []>} : vector<8x32xf32>, vector<32x16xf32>, vector<8x16xf32> -> vector<8x16xf32>
    %c0_42 = arith.constant 0 : index
    %c0_43 = arith.constant 0 : index
    %128 = vector.load %arg5[%c0_42, %c0_43] : memref<1x16xf32, #tpu.memory_space<vmem>>, vector<1x16xf32>
    %129 = vector.broadcast %128 : vector<1x16xf32> to vector<8x16xf32>
    %130 = arith.addf %127, %129 : vector<8x16xf32>
    %131 = vector.extract_strided_slice %130 {offsets = [0, 0], sizes = [2, 16], strides = [1, 1]} : vector<8x16xf32> to vector<2x16xf32>
    %c0_44 = arith.constant 0 : index
    %c0_45 = arith.constant 0 : index
    %132 = vector.load %arg6[%c0_44, %c0_45] : memref<2x16xf32, #tpu.memory_space<vmem>>, vector<2x16xf32>
    tpu.vector_store %arg6[%c0_44, %c0_45], %131 {strides = array<i32>} : memref<2x16xf32, #tpu.memory_space<vmem>>, vector<2x16xf32>,
    return
  }
}

</mosaic_0001>

<llo_original>
// kernel: tpu_custom_call.1
$region0: #{tpu_custom_call.1}
  #allocation0 [shape = 'u32[]', space=smem, size = 0x4, offset = 0x4, fixed_abs, tag = 'smem constant byte address 0x4 - core index']
  #allocation1 [shape = 'u32[144,128]{1,0:T(1,128)}', space=vmem, size = 0x12000, scoped, tag = 'internal scratch']
  %s0 = inlined_call_operand.vmem [shape: s32[2,8], index: 0, kind: input, shape index: {}]
  %s1 = inlined_call_operand.vmem [shape: f32[16,32], index: 1, kind: input, shape index: {}]
  %s2 = inlined_call_operand.vmem [shape: f32[32,32], index: 2, kind: input, shape index: {}]
  %s3 = inlined_call_operand.vmem [shape: f32[1,32], index: 3, kind: input, shape index: {}]
  %s4 = inlined_call_operand.vmem [shape: f32[32,16], index: 4, kind: input, shape index: {}]
  %s5 = inlined_call_operand.vmem [shape: f32[1,16], index: 5, kind: input, shape index: {}]
  %s6 = inlined_call_operand.hbm [shape: f32[2,16], index: 6, kind: output, shape index: {}]
  %s7 = sld [smem:[#allocation0]]
  $region38: #{tpu_custom_call.1} parent=0
    _
  %s9 = ssub.s32 1, %s7
  %s10 = scalar_select 0, %s9, %s7
  $region1: #{tpu_custom_call.1} parent=0
    #allocation2 [shape = 'u8[1024]{0}', space=smem, size = 0x400, scoped, tag = 'input window, operand 0, single buffered']
    #allocation3 [shape = 's32[1]{0}', space=sflag, size = 0x4, scoped, tag = 'scoped memory for tpu_custom_call.1']
    #allocation4 [shape = 's32[1]{0}', space=sflag, size = 0x4, scoped, tag = 'scoped memory for tpu_custom_call.1']
    #allocation5 [shape = 'u8[1024]{0}', space=vmem, size = 0x400, scoped, tag = 'output window, operand 0, single buffered']
    %11 = vsyncpa [#allocation4], 0
    %12 = vsyncpa [#allocation3], 0
    // Predicated region
    $region2: #{tpu_custom_call.1} parent=1 // pred_check
      _
    $region3: #{tpu_custom_call.1} parent=1 // pred_check_branch
      %14 = sbr.rel (0) target = $region5
    $region4: #{tpu_custom_call.1} parent=1 // pred_region
      %s16 = ssub.s32 32, 32
      %17 = vsyncadd [#allocation4], %s16
      %s19 = sshll.u32 %s0, 4
      %s20 = int_to_ptr.vmem [resolvable:$true] %s19
      %22 = dma.vmem_to_smem %s20, 32, [#allocation2], [#allocation4]
    $region5: #{tpu_custom_call.1} parent=1 // pred_fallthru
      _
    // Predicated region
    $region6: #{tpu_custom_call.1} parent=1 // pred_check
      _
    $region7: #{tpu_custom_call.1} parent=1 // pred_check_branch
      %24 = sbr.rel (0) target = $region9
    $region8: #{tpu_custom_call.1} parent=1 // pred_region
      _
    $region9: #{tpu_custom_call.1} parent=1 // pred_fallthru
      _
    // Predicated region
    $region10: #{tpu_custom_call.1} parent=1 // pred_check
      _
    $region11: #{tpu_custom_call.1} parent=1 // pred_check_branch
      %26 = sbr.rel (0) target = $region13
    $region12: #{tpu_custom_call.1} parent=1 // pred_region
      _
    $region13: #{tpu_custom_call.1} parent=1 // pred_fallthru
      _
    // Predicated region
    $region14: #{tpu_custom_call.1} parent=1 // pred_check
      _
    $region15: #{tpu_custom_call.1} parent=1 // pred_check_branch
      %28 = sbr.rel (0) target = $region17
    $region16: #{tpu_custom_call.1} parent=1 // pred_region
      _
    $region17: #{tpu_custom_call.1} parent=1 // pred_fallthru
      _
    // Predicated region
    $region18: #{tpu_custom_call.1} parent=1 // pred_check
      _
    $region19: #{tpu_custom_call.1} parent=1 // pred_check_branch
      %30 = sbr.rel (0) target = $region21
    $region20: #{tpu_custom_call.1} parent=1 // pred_region
      _
    $region21: #{tpu_custom_call.1} parent=1 // pred_fallthru
      _
    // Predicated region
    $region22: #{tpu_custom_call.1} parent=1 // pred_check
      _
    $region23: #{tpu_custom_call.1} parent=1 // pred_check_branch
      %32 = sbr.rel (0) target = $region25
    $region24: #{tpu_custom_call.1} parent=1 // pred_region
      _
    $region25: #{tpu_custom_call.1} parent=1 // pred_fallthru
      _
    // Predicated region
    $region26: #{tpu_custom_call.1} parent=1 // pred_check
      _
    $region27: #{tpu_custom_call.1} parent=1 // pred_check_branch
      %34 = sbr.rel (0) target = $region29
    $region28: #{tpu_custom_call.1} parent=1 // pred_region
      %35 = dma.done [#allocation4], 32
    $region29: #{tpu_custom_call.1} parent=1 // pred_fallthru
      _
    %36 = sfence
    %v37 = vlaneseq
    %v38 = vshrl.u32 %v37, 7
    %v39 = vadd.s32 %v38, 8
    %v40 = vadd.s32 %v38, 16
    %v41 = vadd.s32 %v38, 24
    %v42 = vadd.s32 %v38, 32
    %v43 = vadd.s32 %v38, 40
    %v44 = vadd.s32 %v38, 48
    %v45 = vadd.s32 %v38, 56
    %vm46 = vcmp.eq.s32.totalorder %v38, 0
    %vm47 = vcmp.eq.s32.totalorder %v39, 0
    %vm48 = vcmp.eq.s32.totalorder %v40, 0
    %vm49 = vcmp.eq.s32.totalorder %v41, 0
    %vm50 = vcmp.eq.s32.totalorder %v42, 0
    %vm51 = vcmp.eq.s32.totalorder %v43, 0
    %vm52 = vcmp.eq.s32.totalorder %v44, 0
    %vm53 = vcmp.eq.s32.totalorder %v45, 0
    %s54 = sld [smem:[#allocation2]]
    %v55 = vstv %s54
    %v56 = vsel %vm46, %v55, 4294967295
    %v57 = vsel %vm47, %v55, 4294967295
    %v58 = vsel %vm48, %v55, 4294967295
    %v59 = vsel %vm49, %v55, 4294967295
    %v60 = vsel %vm50, %v55, 4294967295
    %v61 = vsel %vm51, %v55, 4294967295
    %v62 = vsel %vm52, %v55, 4294967295
    %v63 = vsel %vm53, %v55, 4294967295
    %vm64 = vcmp.eq.s32.totalorder %v38, 1
    %vm65 = vcmp.eq.s32.totalorder %v39, 1
    %vm66 = vcmp.eq.s32.totalorder %v40, 1
    %vm67 = vcmp.eq.s32.totalorder %v41, 1
    %vm68 = vcmp.eq.s32.totalorder %v42, 1
    %vm69 = vcmp.eq.s32.totalorder %v43, 1
    %vm70 = vcmp.eq.s32.totalorder %v44, 1
    %vm71 = vcmp.eq.s32.totalorder %v45, 1
    %s72 = sld [smem:[#allocation2 + $0x80]]
    %v73 = vstv %s72
    %v74 = vsel %vm64, %v73, %v56
    %v75 = vsel %vm65, %v73, %v57
    %v76 = vsel %vm66, %v73, %v58
    %v77 = vsel %vm67, %v73, %v59
    %v78 = vsel %vm68, %v73, %v60
    %v79 = vsel %vm69, %v73, %v61
    %v80 = vsel %vm70, %v73, %v62
    %v81 = vsel %vm71, %v73, %v63
    %vm82 = vcmp.eq.s32.totalorder %v38, 8
    %vm83 = vcmp.eq.s32.totalorder %v39, 8
    %vm84 = vcmp.eq.s32.totalorder %v40, 8
    %vm85 = vcmp.eq.s32.totalorder %v41, 8
    %vm86 = vcmp.eq.s32.totalorder %v42, 8
    %vm87 = vcmp.eq.s32.totalorder %v43, 8
    %vm88 = vcmp.eq.s32.totalorder %v44, 8
    %vm89 = vcmp.eq.s32.totalorder %v45, 8
    %s90 = sld [smem:[#allocation2 + $0x1]]
    %v91 = vstv %s90
    %v92 = vsel %vm82, %v91, %v74
    %v93 = vsel %vm83, %v91, %v75
    %v94 = vsel %vm84, %v91, %v76
    %v95 = vsel %vm85, %v91, %v77
    %v96 = vsel %vm86, %v91, %v78
    %v97 = vsel %vm87, %v91, %v79
    %v98 = vsel %vm88, %v91, %v80
    %v99 = vsel %vm89, %v91, %v81
    %vm100 = vcmp.eq.s32.totalorder %v38, 9
    %vm101 = vcmp.eq.s32.totalorder %v39, 9
    %vm102 = vcmp.eq.s32.totalorder %v40, 9
    %vm103 = vcmp.eq.s32.totalorder %v41, 9
    %vm104 = vcmp.eq.s32.totalorder %v42, 9
    %vm105 = vcmp.eq.s32.totalorder %v43, 9
    %vm106 = vcmp.eq.s32.totalorder %v44, 9
    %vm107 = vcmp.eq.s32.totalorder %v45, 9
    %s108 = sld [smem:[#allocation2 + $0x81]]
    %v109 = vstv %s108
    %v110 = vsel %vm100, %v109, %v92
    %v111 = vsel %vm101, %v109, %v93
    %v112 = vsel %vm102, %v109, %v94
    %v113 = vsel %vm103, %v109, %v95
    %v114 = vsel %vm104, %v109, %v96
    %v115 = vsel %vm105, %v109, %v97
    %v116 = vsel %vm106, %v109, %v98
    %v117 = vsel %vm107, %v109, %v99
    %vm118 = vcmp.eq.s32.totalorder %v38, 16
    %vm119 = vcmp.eq.s32.totalorder %v39, 16
    %vm120 = vcmp.eq.s32.totalorder %v40, 16
    %vm121 = vcmp.eq.s32.totalorder %v41, 16
    %vm122 = vcmp.eq.s32.totalorder %v42, 16
    %vm123 = vcmp.eq.s32.totalorder %v43, 16
    %vm124 = vcmp.eq.s32.totalorder %v44, 16
    %vm125 = vcmp.eq.s32.totalorder %v45, 16
    %s126 = sld [smem:[#allocation2 + $0x2]]
    %v127 = vstv %s126
    %v128 = vsel %vm118, %v127, %v110
    %v129 = vsel %vm119, %v127, %v111
    %v130 = vsel %vm120, %v127, %v112
    %v131 = vsel %vm121, %v127, %v113
    %v132 = vsel %vm122, %v127, %v114
    %v133 = vsel %vm123, %v127, %v115
    %v134 = vsel %vm124, %v127, %v116
    %v135 = vsel %vm125, %v127, %v117
    %vm136 = vcmp.eq.s32.totalorder %v38, 17
    %vm137 = vcmp.eq.s32.totalorder %v39, 17
    %vm138 = vcmp.eq.s32.totalorder %v40, 17
    %vm139 = vcmp.eq.s32.totalorder %v41, 17
    %vm140 = vcmp.eq.s32.totalorder %v42, 17
    %vm141 = vcmp.eq.s32.totalorder %v43, 17
    %vm142 = vcmp.eq.s32.totalorder %v44, 17
    %vm143 = vcmp.eq.s32.totalorder %v45, 17
    %s144 = sld [smem:[#allocation2 + $0x82]]
    %v145 = vstv %s144
    %v146 = vsel %vm136, %v145, %v128
    %v147 = vsel %vm137, %v145, %v129
    %v148 = vsel %vm138, %v145, %v130
    %v149 = vsel %vm139, %v145, %v131
    %v150 = vsel %vm140, %v145, %v132
    %v151 = vsel %vm141, %v145, %v133
    %v152 = vsel %vm142, %v145, %v134
    %v153 = vsel %vm143, %v145, %v135
    %vm154 = vcmp.eq.s32.totalorder %v38, 24
    %vm155 = vcmp.eq.s32.totalorder %v39, 24
    %vm156 = vcmp.eq.s32.totalorder %v40, 24
    %vm157 = vcmp.eq.s32.totalorder %v41, 24
    %vm158 = vcmp.eq.s32.totalorder %v42, 24
    %vm159 = vcmp.eq.s32.totalorder %v43, 24
    %vm160 = vcmp.eq.s32.totalorder %v44, 24
    %vm161 = vcmp.eq.s32.totalorder %v45, 24
    %s162 = sld [smem:[#allocation2 + $0x3]]
    %v163 = vstv %s162
    %v164 = vsel %vm154, %v163, %v146
    %v165 = vsel %vm155, %v163, %v147
    %v166 = vsel %vm156, %v163, %v148
    %v167 = vsel %vm157, %v163, %v149
    %v168 = vsel %vm158, %v163, %v150
    %v169 = vsel %vm159, %v163, %v151
    %v170 = vsel %vm160, %v163, %v152
    %v171 = vsel %vm161, %v163, %v153
    %vm172 = vcmp.eq.s32.totalorder %v38, 25
    %vm173 = vcmp.eq.s32.totalorder %v39, 25
    %vm174 = vcmp.eq.s32.totalorder %v40, 25
    %vm175 = vcmp.eq.s32.totalorder %v41, 25
    %vm176 = vcmp.eq.s32.totalorder %v42, 25
    %vm177 = vcmp.eq.s32.totalorder %v43, 25
    %vm178 = vcmp.eq.s32.totalorder %v44, 25
    %vm179 = vcmp.eq.s32.totalorder %v45, 25
    %s180 = sld [smem:[#allocation2 + $0x83]]
    %v181 = vstv %s180
    %v182 = vsel %vm172, %v181, %v164
    %v183 = vsel %vm173, %v181, %v165
    %v184 = vsel %vm174, %v181, %v166
    %v185 = vsel %vm175, %v181, %v167
    %v186 = vsel %vm176, %v181, %v168
    %v187 = vsel %vm177, %v181, %v169
    %v188 = vsel %vm178, %v181, %v170
    %v189 = vsel %vm179, %v181, %v171
    %vm190 = vcmp.eq.s32.totalorder %v38, 32
    %vm191 = vcmp.eq.s32.totalorder %v39, 32
    %vm192 = vcmp.eq.s32.totalorder %v40, 32
    %vm193 = vcmp.eq.s32.totalorder %v41, 32
    %vm194 = vcmp.eq.s32.totalorder %v42, 32
    %vm195 = vcmp.eq.s32.totalorder %v43, 32
    %vm196 = vcmp.eq.s32.totalorder %v44, 32
    %vm197 = vcmp.eq.s32.totalorder %v45, 32
    %s198 = sld [smem:[#allocation2 + $0x4]]
    %v199 = vstv %s198
    %v200 = vsel %vm190, %v199, %v182
    %v201 = vsel %vm191, %v199, %v183
    %v202 = vsel %vm192, %v199, %v184
    %v203 = vsel %vm193, %v199, %v185
    %v204 = vsel %vm194, %v199, %v186
    %v205 = vsel %vm195, %v199, %v187
    %v206 = vsel %vm196, %v199, %v188
    %v207 = vsel %vm197, %v199, %v189
    %vm208 = vcmp.eq.s32.totalorder %v38, 33
    %vm209 = vcmp.eq.s32.totalorder %v39, 33
    %vm210 = vcmp.eq.s32.totalorder %v40, 33
    %vm211 = vcmp.eq.s32.totalorder %v41, 33
    %vm212 = vcmp.eq.s32.totalorder %v42, 33
    %vm213 = vcmp.eq.s32.totalorder %v43, 33
    %vm214 = vcmp.eq.s32.totalorder %v44, 33
    %vm215 = vcmp.eq.s32.totalorder %v45, 33
    %s216 = sld [smem:[#allocation2 + $0x84]]
    %v217 = vstv %s216
    %v218 = vsel %vm208, %v217, %v200
    %v219 = vsel %vm209, %v217, %v201
    %v220 = vsel %vm210, %v217, %v202
    %v221 = vsel %vm211, %v217, %v203
    %v222 = vsel %vm212, %v217, %v204
    %v223 = vsel %vm213, %v217, %v205
    %v224 = vsel %vm214, %v217, %v206
    %v225 = vsel %vm215, %v217, %v207
    %vm226 = vcmp.eq.s32.totalorder %v38, 40
    %vm227 = vcmp.eq.s32.totalorder %v39, 40
    %vm228 = vcmp.eq.s32.totalorder %v40, 40
    %vm229 = vcmp.eq.s32.totalorder %v41, 40
    %vm230 = vcmp.eq.s32.totalorder %v42, 40
    %vm231 = vcmp.eq.s32.totalorder %v43, 40
    %vm232 = vcmp.eq.s32.totalorder %v44, 40
    %vm233 = vcmp.eq.s32.totalorder %v45, 40
    %s234 = sld [smem:[#allocation2 + $0x5]]
    %v235 = vstv %s234
    %v236 = vsel %vm226, %v235, %v218
    %v237 = vsel %vm227, %v235, %v219
    %v238 = vsel %vm228, %v235, %v220
    %v239 = vsel %vm229, %v235, %v221
    %v240 = vsel %vm230, %v235, %v222
    %v241 = vsel %vm231, %v235, %v223
    %v242 = vsel %vm232, %v235, %v224
    %v243 = vsel %vm233, %v235, %v225
    %vm244 = vcmp.eq.s32.totalorder %v38, 41
    %vm245 = vcmp.eq.s32.totalorder %v39, 41
    %vm246 = vcmp.eq.s32.totalorder %v40, 41
    %vm247 = vcmp.eq.s32.totalorder %v41, 41
    %vm248 = vcmp.eq.s32.totalorder %v42, 41
    %vm249 = vcmp.eq.s32.totalorder %v43, 41
    %vm250 = vcmp.eq.s32.totalorder %v44, 41
    %vm251 = vcmp.eq.s32.totalorder %v45, 41
    %s252 = sld [smem:[#allocation2 + $0x85]]
    %v253 = vstv %s252
    %v254 = vsel %vm244, %v253, %v236
    %v255 = vsel %vm245, %v253, %v237
    %v256 = vsel %vm246, %v253, %v238
    %v257 = vsel %vm247, %v253, %v239
    %v258 = vsel %vm248, %v253, %v240
    %v259 = vsel %vm249, %v253, %v241
    %v260 = vsel %vm250, %v253, %v242
    %v261 = vsel %vm251, %v253, %v243
    %vm262 = vcmp.eq.s32.totalorder %v38, 48
    %vm263 = vcmp.eq.s32.totalorder %v39, 48
    %vm264 = vcmp.eq.s32.totalorder %v40, 48
    %vm265 = vcmp.eq.s32.totalorder %v41, 48
    %vm266 = vcmp.eq.s32.totalorder %v42, 48
    %vm267 = vcmp.eq.s32.totalorder %v43, 48
    %vm268 = vcmp.eq.s32.totalorder %v44, 48
    %vm269 = vcmp.eq.s32.totalorder %v45, 48
    %s270 = sld [smem:[#allocation2 + $0x6]]
    %v271 = vstv %s270
    %v272 = vsel %vm262, %v271, %v254
    %v273 = vsel %vm263, %v271, %v255
    %v274 = vsel %vm264, %v271, %v256
    %v275 = vsel %vm265, %v271, %v257
    %v276 = vsel %vm266, %v271, %v258
    %v277 = vsel %vm267, %v271, %v259
    %v278 = vsel %vm268, %v271, %v260
    %v279 = vsel %vm269, %v271, %v261
    %vm280 = vcmp.eq.s32.totalorder %v38, 49
    %vm281 = vcmp.eq.s32.totalorder %v39, 49
    %vm282 = vcmp.eq.s32.totalorder %v40, 49
    %vm283 = vcmp.eq.s32.totalorder %v41, 49
    %vm284 = vcmp.eq.s32.totalorder %v42, 49
    %vm285 = vcmp.eq.s32.totalorder %v43, 49
    %vm286 = vcmp.eq.s32.totalorder %v44, 49
    %vm287 = vcmp.eq.s32.totalorder %v45, 49
    %s288 = sld [smem:[#allocation2 + $0x86]]
    %v289 = vstv %s288
    %v290 = vsel %vm280, %v289, %v272
    %v291 = vsel %vm281, %v289, %v273
    %v292 = vsel %vm282, %v289, %v274
    %v293 = vsel %vm283, %v289, %v275
    %v294 = vsel %vm284, %v289, %v276
    %v295 = vsel %vm285, %v289, %v277
    %v296 = vsel %vm286, %v289, %v278
    %v297 = vsel %vm287, %v289, %v279
    %vm298 = vcmp.eq.s32.totalorder %v38, 56
    %vm299 = vcmp.eq.s32.totalorder %v39, 56
    %vm300 = vcmp.eq.s32.totalorder %v40, 56
    %vm301 = vcmp.eq.s32.totalorder %v41, 56
    %vm302 = vcmp.eq.s32.totalorder %v42, 56
    %vm303 = vcmp.eq.s32.totalorder %v43, 56
    %vm304 = vcmp.eq.s32.totalorder %v44, 56
    %vm305 = vcmp.eq.s32.totalorder %v45, 56
    %s306 = sld [smem:[#allocation2 + $0x7]]
    %v307 = vstv %s306
    %v308 = vsel %vm298, %v307, %v290
    %v309 = vsel %vm299, %v307, %v291
    %v310 = vsel %vm300, %v307, %v292
    %v311 = vsel %vm301, %v307, %v293
    %v312 = vsel %vm302, %v307, %v294
    %v313 = vsel %vm303, %v307, %v295
    %v314 = vsel %vm304, %v307, %v296
    %v315 = vsel %vm305, %v307, %v297
    %vm316 = vcmp.eq.s32.totalorder %v38, 57
    %vm317 = vcmp.eq.s32.totalorder %v39, 57
    %vm318 = vcmp.eq.s32.totalorder %v40, 57
    %vm319 = vcmp.eq.s32.totalorder %v41, 57
    %vm320 = vcmp.eq.s32.totalorder %v42, 57
    %vm321 = vcmp.eq.s32.totalorder %v43, 57
    %vm322 = vcmp.eq.s32.totalorder %v44, 57
    %vm323 = vcmp.eq.s32.totalorder %v45, 57
    %s324 = sld [smem:[#allocation2 + $0x87]]
    %v325 = vstv %s324
    %v326 = vsel %vm316, %v325, %v308
    %v327 = vsel %vm317, %v325, %v309
    %v328 = vsel %vm318, %v325, %v310
    %v329 = vsel %vm319, %v325, %v311
    %v330 = vsel %vm320, %v325, %v312
    %v331 = vsel %vm321, %v325, %v313
    %v332 = vsel %vm322, %v325, %v314
    %v333 = vsel %vm323, %v325, %v315
    %v334 = vlaneseq
    %v335 = vand.u32 %v334, 127
    %vm336 = vcmp.eq.s32.totalorder %v335, %v326
    %vm337 = vcmp.eq.s32.totalorder %v335, %v327
    %vm338 = vcmp.eq.s32.totalorder %v335, %v328
    %vm339 = vcmp.eq.s32.totalorder %v335, %v329
    %vm340 = vcmp.eq.s32.totalorder %v335, %v330
    %vm341 = vcmp.eq.s32.totalorder %v335, %v331
    %vm342 = vcmp.eq.s32.totalorder %v335, %v332
    %vm343 = vcmp.eq.s32.totalorder %v335, %v333
    %v344 = vsel %vm336, 1, 0
    %v345 = vsel %vm337, 1, 0
    %v346 = vsel %vm338, 1, 0
    %v347 = vsel %vm339, 1, 0
    %v348 = vsel %vm340, 1, 0
    %v349 = vsel %vm341, 1, 0
    %v350 = vsel %vm342, 1, 0
    %v351 = vsel %vm343, 1, 0
    %v352 = vcvt.s32.f32 %v344
    %v353 = vcvt.s32.f32 %v345
    %v354 = vcvt.s32.f32 %v346
    %v355 = vcvt.s32.f32 %v347
    %v356 = vcvt.s32.f32 %v348
    %v357 = vcvt.s32.f32 %v349
    %v358 = vcvt.s32.f32 %v350
    %v359 = vcvt.s32.f32 %v351
    %v360 = vld [vmem:[%s1] sm:$0xff]
    %v361 = vld [vmem:[%s1 + $0x8] sm:$0xff]
    %v362 = vld [vmem:[%s3] sm:$0x1]
    %v364 = vlaneseq
    %v365 = vshrl.u32 %v364, 7
    %v366 = vsub.s32 0, %v365
    %v367 = vrot.slane %v362, %v366
    %vm369 = vcmask 130048
    %v371 = vsel %vm369, %v352, 0
    %v374 = vsel %vm369, %v353, 0
    %v377 = vsel %vm369, %v354, 0
    %v380 = vsel %vm369, %v355, 0
    %v383 = vsel %vm369, %v356, 0
    %v386 = vsel %vm369, %v357, 0
    %v389 = vsel %vm369, %v358, 0
    %v392 = vsel %vm369, %v359, 0
    %394 = vmatprep.subr.mxu0 0.0
    %395 = vmatpush1.msra.mxu0 0.0
    %396 = vmatprep.subr.mxu0 0.0
    %397 = vmatpush1.msra.mxu0 0.0
    %398 = vmatprep.subr.mxu0 0.0
    %399 = vmatpush1.msra.mxu0 0.0
    %400 = vmatprep.subr.mxu0 0.0
    %401 = vmatpush1.msra.mxu0 0.0
    %402 = vmatprep.subr.mxu0 0.0
    %403 = vmatpush1.msra.mxu0 0.0
    %404 = vmatprep.subr.mxu0 0.0
    %405 = vmatpush1.msra.mxu0 0.0
    %406 = vmatprep.subr.mxu0 0.0
    %407 = vmatpush1.msra.mxu0 0.0
    %408 = vmatprep.subr.mxu0 0.0
    %409 = vmatpush1.msra.mxu0 0.0
    %410 = vmatprep.subr.mxu0 0.0
    %411 = vmatpush1.msra.mxu0 0.0
    %412 = vmatprep.subr.mxu0 0.0
    %413 = vmatpush1.msra.mxu0 0.0
    %414 = vmatprep.subr.mxu0 0.0
    %415 = vmatpush1.msra.mxu0 0.0
    %416 = vmatprep.subr.mxu0 0.0
    %417 = vmatpush1.msra.mxu0 0.0
    %418 = vmatprep.subr.mxu0 0.0
    %419 = vmatpush1.msra.mxu0 0.0
    %420 = vmatprep.subr.mxu0 0.0
    %421 = vmatpush1.msra.mxu0 0.0
    %422 = vmatprep.subr.mxu0 0.0
    %423 = vmatpush1.msra.mxu0 %v361
    %424 = vmatprep.subr.mxu0 0.0
    %425 = vmatpush1.msra.mxu0 %v360
    %426 = vmatprep.subr.mxu0 0.0
    %427 = vmatpush2.msra.mxu0 0.0
    %428 = vmatprep.subr.mxu0 0.0
    %429 = vmatpush2.msra.mxu0 0.0
    %430 = vmatprep.subr.mxu0 0.0
    %431 = vmatpush2.msra.mxu0 0.0
    %432 = vmatprep.subr.mxu0 0.0
    %433 = vmatpush2.msra.mxu0 0.0
    %434 = vmatprep.subr.mxu0 0.0
    %435 = vmatpush2.msra.mxu0 0.0
    %436 = vmatprep.subr.mxu0 0.0
    %437 = vmatpush2.msra.mxu0 0.0
    %438 = vmatprep.subr.mxu0 0.0
    %439 = vmatpush2.msra.mxu0 0.0
    %440 = vmatprep.subr.mxu0 0.0
    %441 = vmatpush2.msra.mxu0 0.0
    %442 = vmatprep.subr.mxu0 0.0
    %443 = vmatpush2.msra.mxu0 0.0
    %444 = vmatprep.subr.mxu0 0.0
    %445 = vmatpush2.msra.mxu0 0.0
    %446 = vmatprep.subr.mxu0 0.0
    %447 = vmatpush2.msra.mxu0 0.0
    %448 = vmatprep.subr.mxu0 0.0
    %449 = vmatpush2.msra.mxu0 0.0
    %450 = vmatprep.subr.mxu0 0.0
    %451 = vmatpush2.msra.mxu0 0.0
    %452 = vmatprep.subr.mxu0 0.0
    %453 = vmatpush2.msra.mxu0 0.0
    %454 = vmatprep.subr.mxu0 0.0
    %455 = vmatpush2.msra.mxu0 0.0
    %456 = vmatprep.subr.mxu0 0.0
    %457 = vmatpush2.msra.mxu0 0.0
    %458 = vmatprep.mubr.f32.mxu0 0.0
    %459 = vmatmul.mubr.f32.gmra.mxu0 %v371
    %v460 = vpop.f32.mrf.mxu0
    %v461 = vadd.f32 %v367, %v460
    %v462 = vpop.f32.mrf.mxu0
    %463 = vmatprep.mubr.f32.mxu0 0.0
    %464 = vmatmul.mubr.f32.gmra.mxu0 %v374
    %v465 = vpop.f32.mrf.mxu0
    %v466 = vadd.f32 %v367, %v465
    %v467 = vpop.f32.mrf.mxu0
    %468 = vmatprep.mubr.f32.mxu0 0.0
    %469 = vmatmul.mubr.f32.gmra.mxu0 %v377
    %v470 = vpop.f32.mrf.mxu0
    %v471 = vadd.f32 %v367, %v470
    %v472 = vpop.f32.mrf.mxu0
    %473 = vmatprep.mubr.f32.mxu0 0.0
    %474 = vmatmul.mubr.f32.gmra.mxu0 %v380
    %v475 = vpop.f32.mrf.mxu0
    %v476 = vadd.f32 %v367, %v475
    %v477 = vpop.f32.mrf.mxu0
    %478 = vmatprep.mubr.f32.mxu0 0.0
    %479 = vmatmul.mubr.f32.gmra.mxu0 %v383
    %v480 = vpop.f32.mrf.mxu0
    %v481 = vadd.f32 %v367, %v480
    %v482 = vpop.f32.mrf.mxu0
    %483 = vmatprep.mubr.f32.mxu0 0.0
    %484 = vmatmul.mubr.f32.gmra.mxu0 %v386
    %v485 = vpop.f32.mrf.mxu0
    %v486 = vadd.f32 %v367, %v485
    %v487 = vpop.f32.mrf.mxu0
    %488 = vmatprep.mubr.f32.mxu0 0.0
    %489 = vmatmul.mubr.f32.gmra.mxu0 %v389
    %v490 = vpop.f32.mrf.mxu0
    %v491 = vadd.f32 %v367, %v490
    %v492 = vpop.f32.mrf.mxu0
    %493 = vmatprep.mubr.f32.mxu0 0.0
    %494 = vmatmul.mubr.f32.gmra.mxu0 %v392
    %v495 = vpop.f32.mrf.mxu0
    %v496 = vadd.f32 %v367, %v495
    %v497 = vpop.f32.mrf.mxu0
    %498 = vdwg.mxu0
    %v499 = vld [vmem:[%s2] sm:$0xff]
    %v500 = vld [vmem:[%s2 + $0x8] sm:$0xff]
    %v501 = vld [vmem:[%s2 + $0x10] sm:$0xff]
    %v502 = vld [vmem:[%s2 + $0x18] sm:$0xff]
    %vm503 = vcmask 261120
    %v505 = vsel %vm503, 0.0, 0
    %507 = vmatprep.subr.mxu0 0.0
    %508 = vmatpush1.msra.mxu0 0.0
    %509 = vmatprep.subr.mxu0 0.0
    %510 = vmatpush1.msra.mxu0 0.0
    %511 = vmatprep.subr.mxu0 0.0
    %512 = vmatpush1.msra.mxu0 0.0
    %513 = vmatprep.subr.mxu0 0.0
    %514 = vmatpush1.msra.mxu0 0.0
    %515 = vmatprep.subr.mxu0 0.0
    %516 = vmatpush1.msra.mxu0 0.0
    %517 = vmatprep.subr.mxu0 0.0
    %518 = vmatpush1.msra.mxu0 0.0
    %519 = vmatprep.subr.mxu0 0.0
    %520 = vmatpush1.msra.mxu0 0.0
    %521 = vmatprep.subr.mxu0 0.0
    %522 = vmatpush1.msra.mxu0 0.0
    %523 = vmatprep.subr.mxu0 0.0
    %524 = vmatpush1.msra.mxu0 0.0
    %525 = vmatprep.subr.mxu0 0.0
    %526 = vmatpush1.msra.mxu0 0.0
    %527 = vmatprep.subr.mxu0 0.0
    %528 = vmatpush1.msra.mxu0 0.0
    %529 = vmatprep.subr.mxu0 0.0
    %530 = vmatpush1.msra.mxu0 0.0
    %531 = vmatprep.subr.mxu0 0.0
    %532 = vmatpush1.msra.mxu0 %v502
    %533 = vmatprep.subr.mxu0 0.0
    %534 = vmatpush1.msra.mxu0 %v501
    %535 = vmatprep.subr.mxu0 0.0
    %536 = vmatpush1.msra.mxu0 %v500
    %537 = vmatprep.subr.mxu0 0.0
    %538 = vmatpush1.msra.mxu0 %v499
    %539 = vmatprep.subr.mxu0 0.0
    %540 = vmatpush2.msra.mxu0 0.0
    %541 = vmatprep.subr.mxu0 0.0
    %542 = vmatpush2.msra.mxu0 0.0
    %543 = vmatprep.subr.mxu0 0.0
    %544 = vmatpush2.msra.mxu0 0.0
    %545 = vmatprep.subr.mxu0 0.0
    %546 = vmatpush2.msra.mxu0 0.0
    %547 = vmatprep.subr.mxu0 0.0
    %548 = vmatpush2.msra.mxu0 0.0
    %549 = vmatprep.subr.mxu0 0.0
    %550 = vmatpush2.msra.mxu0 0.0
    %551 = vmatprep.subr.mxu0 0.0
    %552 = vmatpush2.msra.mxu0 0.0
    %553 = vmatprep.subr.mxu0 0.0
    %554 = vmatpush2.msra.mxu0 0.0
    %555 = vmatprep.subr.mxu0 0.0
    %556 = vmatpush2.msra.mxu0 0.0
    %557 = vmatprep.subr.mxu0 0.0
    %558 = vmatpush2.msra.mxu0 0.0
    %559 = vmatprep.subr.mxu0 0.0
    %560 = vmatpush2.msra.mxu0 0.0
    %561 = vmatprep.subr.mxu0 0.0
    %562 = vmatpush2.msra.mxu0 0.0
    %563 = vmatprep.subr.mxu0 0.0
    %564 = vmatpush2.msra.mxu0 0.0
    %565 = vmatprep.subr.mxu0 0.0
    %566 = vmatpush2.msra.mxu0 0.0
    %567 = vmatprep.subr.mxu0 0.0
    %568 = vmatpush2.msra.mxu0 0.0
    %569 = vmatprep.subr.mxu0 0.0
    %570 = vmatpush2.msra.mxu0 0.0
    %571 = vmatprep.mubr.f32.mxu0 0.0
    %572 = vmatmul.mubr.f32.gmra.mxu0 %v505
    %v573 = vpop.f32.mrf.mxu0
    %v574 = vadd.f32 0.0, %v573
    %v575 = vpop.f32.mrf.mxu0
    %576 = vdwg.mxu0
    %v577 = vadd.f32 %v461, %v574
    %v578 = vtanh.pop %v577
    %v580 = vsel %vm503, %v578, 0
    %582 = vmatprep.subr.mxu0 0.0
    %583 = vmatpush1.msra.mxu0 0.0
    %584 = vmatprep.subr.mxu0 0.0
    %585 = vmatpush1.msra.mxu0 0.0
    %586 = vmatprep.subr.mxu0 0.0
    %587 = vmatpush1.msra.mxu0 0.0
    %588 = vmatprep.subr.mxu0 0.0
    %589 = vmatpush1.msra.mxu0 0.0
    %590 = vmatprep.subr.mxu0 0.0
    %591 = vmatpush1.msra.mxu0 0.0
    %592 = vmatprep.subr.mxu0 0.0
    %593 = vmatpush1.msra.mxu0 0.0
    %594 = vmatprep.subr.mxu0 0.0
    %595 = vmatpush1.msra.mxu0 0.0
    %596 = vmatprep.subr.mxu0 0.0
    %597 = vmatpush1.msra.mxu0 0.0
    %598 = vmatprep.subr.mxu0 0.0
    %599 = vmatpush1.msra.mxu0 0.0
    %600 = vmatprep.subr.mxu0 0.0
    %601 = vmatpush1.msra.mxu0 0.0
    %602 = vmatprep.subr.mxu0 0.0
    %603 = vmatpush1.msra.mxu0 0.0
    %604 = vmatprep.subr.mxu0 0.0
    %605 = vmatpush1.msra.mxu0 0.0
    %606 = vmatprep.subr.mxu0 0.0
    %607 = vmatpush1.msra.mxu0 %v502
    %608 = vmatprep.subr.mxu0 0.0
    %609 = vmatpush1.msra.mxu0 %v501
    %610 = vmatprep.subr.mxu0 0.0
    %611 = vmatpush1.msra.mxu0 %v500
    %612 = vmatprep.subr.mxu0 0.0
    %613 = vmatpush1.msra.mxu0 %v499
    %614 = vmatprep.subr.mxu0 0.0
    %615 = vmatpush2.msra.mxu0 0.0
    %616 = vmatprep.subr.mxu0 0.0
    %617 = vmatpush2.msra.mxu0 0.0
    %618 = vmatprep.subr.mxu0 0.0
    %619 = vmatpush2.msra.mxu0 0.0
    %620 = vmatprep.subr.mxu0 0.0
    %621 = vmatpush2.msra.mxu0 0.0
    %622 = vmatprep.subr.mxu0 0.0
    %623 = vmatpush2.msra.mxu0 0.0
    %624 = vmatprep.subr.mxu0 0.0
    %625 = vmatpush2.msra.mxu0 0.0
    %626 = vmatprep.subr.mxu0 0.0
    %627 = vmatpush2.msra.mxu0 0.0
    %628 = vmatprep.subr.mxu0 0.0
    %629 = vmatpush2.msra.mxu0 0.0
    %630 = vmatprep.subr.mxu0 0.0
    %631 = vmatpush2.msra.mxu0 0.0
    %632 = vmatprep.subr.mxu0 0.0
    %633 = vmatpush2.msra.mxu0 0.0
    %634 = vmatprep.subr.mxu0 0.0
    %635 = vmatpush2.msra.mxu0 0.0
    %636 = vmatprep.subr.mxu0 0.0
    %637 = vmatpush2.msra.mxu0 0.0
    %638 = vmatprep.subr.mxu0 0.0
    %639 = vmatpush2.msra.mxu0 0.0
    %640 = vmatprep.subr.mxu0 0.0
    %641 = vmatpush2.msra.mxu0 0.0
    %642 = vmatprep.subr.mxu0 0.0
    %643 = vmatpush2.msra.mxu0 0.0
    %644 = vmatprep.subr.mxu0 0.0
    %645 = vmatpush2.msra.mxu0 0.0
    %646 = vmatprep.mubr.f32.mxu0 0.0
    %647 = vmatmul.mubr.f32.gmra.mxu0 %v580
    %v648 = vpop.f32.mrf.mxu0
    %v649 = vadd.f32 0.0, %v648
    %v650 = vpop.f32.mrf.mxu0
    %651 = vdwg.mxu0
    %v652 = vadd.f32 %v466, %v649
    %v653 = vtanh.pop %v652
    %v655 = vsel %vm503, %v653, 0
    %657 = vmatprep.subr.mxu0 0.0
    %658 = vmatpush1.msra.mxu0 0.0
    %659 = vmatprep.subr.mxu0 0.0
    %660 = vmatpush1.msra.mxu0 0.0
    %661 = vmatprep.subr.mxu0 0.0
    %662 = vmatpush1.msra.mxu0 0.0
    %663 = vmatprep.subr.mxu0 0.0
    %664 = vmatpush1.msra.mxu0 0.0
    %665 = vmatprep.subr.mxu0 0.0
    %666 = vmatpush1.msra.mxu0 0.0
    %667 = vmatprep.subr.mxu0 0.0
    %668 = vmatpush1.msra.mxu0 0.0
    %669 = vmatprep.subr.mxu0 0.0
    %670 = vmatpush1.msra.mxu0 0.0
    %671 = vmatprep.subr.mxu0 0.0
    %672 = vmatpush1.msra.mxu0 0.0
    %673 = vmatprep.subr.mxu0 0.0
    %674 = vmatpush1.msra.mxu0 0.0
    %675 = vmatprep.subr.mxu0 0.0
    %676 = vmatpush1.msra.mxu0 0.0
    %677 = vmatprep.subr.mxu0 0.0
    %678 = vmatpush1.msra.mxu0 0.0
    %679 = vmatprep.subr.mxu0 0.0
    %680 = vmatpush1.msra.mxu0 0.0
    %681 = vmatprep.subr.mxu0 0.0
    %682 = vmatpush1.msra.mxu0 %v502
    %683 = vmatprep.subr.mxu0 0.0
    %684 = vmatpush1.msra.mxu0 %v501
    %685 = vmatprep.subr.mxu0 0.0
    %686 = vmatpush1.msra.mxu0 %v500
    %687 = vmatprep.subr.mxu0 0.0
    %688 = vmatpush1.msra.mxu0 %v499
    %689 = vmatprep.subr.mxu0 0.0
    %690 = vmatpush2.msra.mxu0 0.0
    %691 = vmatprep.subr.mxu0 0.0
    %692 = vmatpush2.msra.mxu0 0.0
    %693 = vmatprep.subr.mxu0 0.0
    %694 = vmatpush2.msra.mxu0 0.0
    %695 = vmatprep.subr.mxu0 0.0
    %696 = vmatpush2.msra.mxu0 0.0
    %697 = vmatprep.subr.mxu0 0.0
    %698 = vmatpush2.msra.mxu0 0.0
    %699 = vmatprep.subr.mxu0 0.0
    %700 = vmatpush2.msra.mxu0 0.0
    %701 = vmatprep.subr.mxu0 0.0
    %702 = vmatpush2.msra.mxu0 0.0
    %703 = vmatprep.subr.mxu0 0.0
    %704 = vmatpush2.msra.mxu0 0.0
    %705 = vmatprep.subr.mxu0 0.0
    %706 = vmatpush2.msra.mxu0 0.0
    %707 = vmatprep.subr.mxu0 0.0
    %708 = vmatpush2.msra.mxu0 0.0
    %709 = vmatprep.subr.mxu0 0.0
    %710 = vmatpush2.msra.mxu0 0.0
    %711 = vmatprep.subr.mxu0 0.0
    %712 = vmatpush2.msra.mxu0 0.0
    %713 = vmatprep.subr.mxu0 0.0
    %714 = vmatpush2.msra.mxu0 0.0
    %715 = vmatprep.subr.mxu0 0.0
    %716 = vmatpush2.msra.mxu0 0.0
    %717 = vmatprep.subr.mxu0 0.0
    %718 = vmatpush2.msra.mxu0 0.0
    %719 = vmatprep.subr.mxu0 0.0
    %720 = vmatpush2.msra.mxu0 0.0
    %721 = vmatprep.mubr.f32.mxu0 0.0
    %722 = vmatmul.mubr.f32.gmra.mxu0 %v655
    %v723 = vpop.f32.mrf.mxu0
    %v724 = vadd.f32 0.0, %v723
    %v725 = vpop.f32.mrf.mxu0
    %726 = vdwg.mxu0
    %v727 = vadd.f32 %v471, %v724
    %v728 = vtanh.pop %v727
    %v730 = vsel %vm503, %v728, 0
    %732 = vmatprep.subr.mxu0 0.0
    %733 = vmatpush1.msra.mxu0 0.0
    %734 = vmatprep.subr.mxu0 0.0
    %735 = vmatpush1.msra.mxu0 0.0
    %736 = vmatprep.subr.mxu0 0.0
    %737 = vmatpush1.msra.mxu0 0.0
    %738 = vmatprep.subr.mxu0 0.0
    %739 = vmatpush1.msra.mxu0 0.0
    %740 = vmatprep.subr.mxu0 0.0
    %741 = vmatpush1.msra.mxu0 0.0
    %742 = vmatprep.subr.mxu0 0.0
    %743 = vmatpush1.msra.mxu0 0.0
    %744 = vmatprep.subr.mxu0 0.0
    %745 = vmatpush1.msra.mxu0 0.0
    %746 = vmatprep.subr.mxu0 0.0
    %747 = vmatpush1.msra.mxu0 0.0
    %748 = vmatprep.subr.mxu0 0.0
    %749 = vmatpush1.msra.mxu0 0.0
    %750 = vmatprep.subr.mxu0 0.0
    %751 = vmatpush1.msra.mxu0 0.0
    %752 = vmatprep.subr.mxu0 0.0
    %753 = vmatpush1.msra.mxu0 0.0
    %754 = vmatprep.subr.mxu0 0.0
    %755 = vmatpush1.msra.mxu0 0.0
    %756 = vmatprep.subr.mxu0 0.0
    %757 = vmatpush1.msra.mxu0 %v502
    %758 = vmatprep.subr.mxu0 0.0
    %759 = vmatpush1.msra.mxu0 %v501
    %760 = vmatprep.subr.mxu0 0.0
    %761 = vmatpush1.msra.mxu0 %v500
    %762 = vmatprep.subr.mxu0 0.0
    %763 = vmatpush1.msra.mxu0 %v499
    %764 = vmatprep.subr.mxu0 0.0
    %765 = vmatpush2.msra.mxu0 0.0
    %766 = vmatprep.subr.mxu0 0.0
    %767 = vmatpush2.msra.mxu0 0.0
    %768 = vmatprep.subr.mxu0 0.0
    %769 = vmatpush2.msra.mxu0 0.0
    %770 = vmatprep.subr.mxu0 0.0
    %771 = vmatpush2.msra.mxu0 0.0
    %772 = vmatprep.subr.mxu0 0.0
    %773 = vmatpush2.msra.mxu0 0.0
    %774 = vmatprep.subr.mxu0 0.0
    %775 = vmatpush2.msra.mxu0 0.0
    %776 = vmatprep.subr.mxu0 0.0
    %777 = vmatpush2.msra.mxu0 0.0
    %778 = vmatprep.subr.mxu0 0.0
    %779 = vmatpush2.msra.mxu0 0.0
    %780 = vmatprep.subr.mxu0 0.0
    %781 = vmatpush2.msra.mxu0 0.0
    %782 = vmatprep.subr.mxu0 0.0
    %783 = vmatpush2.msra.mxu0 0.0
    %784 = vmatprep.subr.mxu0 0.0
    %785 = vmatpush2.msra.mxu0 0.0
    %786 = vmatprep.subr.mxu0 0.0
    %787 = vmatpush2.msra.mxu0 0.0
    %788 = vmatprep.subr.mxu0 0.0
    %789 = vmatpush2.msra.mxu0 0.0
    %790 = vmatprep.subr.mxu0 0.0
    %791 = vmatpush2.msra.mxu0 0.0
    %792 = vmatprep.subr.mxu0 0.0
    %793 = vmatpush2.msra.mxu0 0.0
    %794 = vmatprep.subr.mxu0 0.0
    %795 = vmatpush2.msra.mxu0 0.0
    %796 = vmatprep.mubr.f32.mxu0 0.0
    %797 = vmatmul.mubr.f32.gmra.mxu0 %v730
    %v798 = vpop.f32.mrf.mxu0
    %v799 = vadd.f32 0.0, %v798
    %v800 = vpop.f32.mrf.mxu0
    %801 = vdwg.mxu0
    %v802 = vadd.f32 %v476, %v799
    %v803 = vtanh.pop %v802
    %v805 = vsel %vm503, %v803, 0
    %807 = vmatprep.subr.mxu0 0.0
    %808 = vmatpush1.msra.mxu0 0.0
    %809 = vmatprep.subr.mxu0 0.0
    %810 = vmatpush1.msra.mxu0 0.0
    %811 = vmatprep.subr.mxu0 0.0
    %812 = vmatpush1.msra.mxu0 0.0
    %813 = vmatprep.subr.mxu0 0.0
    %814 = vmatpush1.msra.mxu0 0.0
    %815 = vmatprep.subr.mxu0 0.0
    %816 = vmatpush1.msra.mxu0 0.0
    %817 = vmatprep.subr.mxu0 0.0
    %818 = vmatpush1.msra.mxu0 0.0
    %819 = vmatprep.subr.mxu0 0.0
    %820 = vmatpush1.msra.mxu0 0.0
    %821 = vmatprep.subr.mxu0 0.0
    %822 = vmatpush1.msra.mxu0 0.0
    %823 = vmatprep.subr.mxu0 0.0
    %824 = vmatpush1.msra.mxu0 0.0
    %825 = vmatprep.subr.mxu0 0.0
    %826 = vmatpush1.msra.mxu0 0.0
    %827 = vmatprep.subr.mxu0 0.0
    %828 = vmatpush1.msra.mxu0 0.0
    %829 = vmatprep.subr.mxu0 0.0
    %830 = vmatpush1.msra.mxu0 0.0
    %831 = vmatprep.subr.mxu0 0.0
    %832 = vmatpush1.msra.mxu0 %v502
    %833 = vmatprep.subr.mxu0 0.0
    %834 = vmatpush1.msra.mxu0 %v501
    %835 = vmatprep.subr.mxu0 0.0
    %836 = vmatpush1.msra.mxu0 %v500
    %837 = vmatprep.subr.mxu0 0.0
    %838 = vmatpush1.msra.mxu0 %v499
    %839 = vmatprep.subr.mxu0 0.0
    %840 = vmatpush2.msra.mxu0 0.0
    %841 = vmatprep.subr.mxu0 0.0
    %842 = vmatpush2.msra.mxu0 0.0
    %843 = vmatprep.subr.mxu0 0.0
    %844 = vmatpush2.msra.mxu0 0.0
    %845 = vmatprep.subr.mxu0 0.0
    %846 = vmatpush2.msra.mxu0 0.0
    %847 = vmatprep.subr.mxu0 0.0
    %848 = vmatpush2.msra.mxu0 0.0
    %849 = vmatprep.subr.mxu0 0.0
    %850 = vmatpush2.msra.mxu0 0.0
    %851 = vmatprep.subr.mxu0 0.0
    %852 = vmatpush2.msra.mxu0 0.0
    %853 = vmatprep.subr.mxu0 0.0
    %854 = vmatpush2.msra.mxu0 0.0
    %855 = vmatprep.subr.mxu0 0.0
    %856 = vmatpush2.msra.mxu0 0.0
    %857 = vmatprep.subr.mxu0 0.0
    %858 = vmatpush2.msra.mxu0 0.0
    %859 = vmatprep.subr.mxu0 0.0
    %860 = vmatpush2.msra.mxu0 0.0
    %861 = vmatprep.subr.mxu0 0.0
    %862 = vmatpush2.msra.mxu0 0.0
    %863 = vmatprep.subr.mxu0 0.0
    %864 = vmatpush2.msra.mxu0 0.0
    %865 = vmatprep.subr.mxu0 0.0
    %866 = vmatpush2.msra.mxu0 0.0
    %867 = vmatprep.subr.mxu0 0.0
    %868 = vmatpush2.msra.mxu0 0.0
    %869 = vmatprep.subr.mxu0 0.0
    %870 = vmatpush2.msra.mxu0 0.0
    %871 = vmatprep.mubr.f32.mxu0 0.0
    %872 = vmatmul.mubr.f32.gmra.mxu0 %v805
    %v873 = vpop.f32.mrf.mxu0
    %v874 = vadd.f32 0.0, %v873
    %v875 = vpop.f32.mrf.mxu0
    %876 = vdwg.mxu0
    %v877 = vadd.f32 %v481, %v874
    %v878 = vtanh.pop %v877
    %v880 = vsel %vm503, %v878, 0
    %882 = vmatprep.subr.mxu0 0.0
    %883 = vmatpush1.msra.mxu0 0.0
    %884 = vmatprep.subr.mxu0 0.0
    %885 = vmatpush1.msra.mxu0 0.0
    %886 = vmatprep.subr.mxu0 0.0
    %887 = vmatpush1.msra.mxu0 0.0
    %888 = vmatprep.subr.mxu0 0.0
    %889 = vmatpush1.msra.mxu0 0.0
    %890 = vmatprep.subr.mxu0 0.0
    %891 = vmatpush1.msra.mxu0 0.0
    %892 = vmatprep.subr.mxu0 0.0
    %893 = vmatpush1.msra.mxu0 0.0
    %894 = vmatprep.subr.mxu0 0.0
    %895 = vmatpush1.msra.mxu0 0.0
    %896 = vmatprep.subr.mxu0 0.0
    %897 = vmatpush1.msra.mxu0 0.0
    %898 = vmatprep.subr.mxu0 0.0
    %899 = vmatpush1.msra.mxu0 0.0
    %900 = vmatprep.subr.mxu0 0.0
    %901 = vmatpush1.msra.mxu0 0.0
    %902 = vmatprep.subr.mxu0 0.0
    %903 = vmatpush1.msra.mxu0 0.0
    %904 = vmatprep.subr.mxu0 0.0
    %905 = vmatpush1.msra.mxu0 0.0
    %906 = vmatprep.subr.mxu0 0.0
    %907 = vmatpush1.msra.mxu0 %v502
    %908 = vmatprep.subr.mxu0 0.0
    %909 = vmatpush1.msra.mxu0 %v501
    %910 = vmatprep.subr.mxu0 0.0
    %911 = vmatpush1.msra.mxu0 %v500
    %912 = vmatprep.subr.mxu0 0.0
    %913 = vmatpush1.msra.mxu0 %v499
    %914 = vmatprep.subr.mxu0 0.0
    %915 = vmatpush2.msra.mxu0 0.0
    %916 = vmatprep.subr.mxu0 0.0
    %917 = vmatpush2.msra.mxu0 0.0
    %918 = vmatprep.subr.mxu0 0.0
    %919 = vmatpush2.msra.mxu0 0.0
    %920 = vmatprep.subr.mxu0 0.0
    %921 = vmatpush2.msra.mxu0 0.0
    %922 = vmatprep.subr.mxu0 0.0
    %923 = vmatpush2.msra.mxu0 0.0
    %924 = vmatprep.subr.mxu0 0.0
    %925 = vmatpush2.msra.mxu0 0.0
    %926 = vmatprep.subr.mxu0 0.0
    %927 = vmatpush2.msra.mxu0 0.0
    %928 = vmatprep.subr.mxu0 0.0
    %929 = vmatpush2.msra.mxu0 0.0
    %930 = vmatprep.subr.mxu0 0.0
    %931 = vmatpush2.msra.mxu0 0.0
    %932 = vmatprep.subr.mxu0 0.0
    %933 = vmatpush2.msra.mxu0 0.0
    %934 = vmatprep.subr.mxu0 0.0
    %935 = vmatpush2.msra.mxu0 0.0
    %936 = vmatprep.subr.mxu0 0.0
    %937 = vmatpush2.msra.mxu0 0.0
    %938 = vmatprep.subr.mxu0 0.0
    %939 = vmatpush2.msra.mxu0 0.0
    %940 = vmatprep.subr.mxu0 0.0
    %941 = vmatpush2.msra.mxu0 0.0
    %942 = vmatprep.subr.mxu0 0.0
    %943 = vmatpush2.msra.mxu0 0.0
    %944 = vmatprep.subr.mxu0 0.0
    %945 = vmatpush2.msra.mxu0 0.0
    %946 = vmatprep.mubr.f32.mxu0 0.0
    %947 = vmatmul.mubr.f32.gmra.mxu0 %v880
    %v948 = vpop.f32.mrf.mxu0
    %v949 = vadd.f32 0.0, %v948
    %v950 = vpop.f32.mrf.mxu0
    %951 = vdwg.mxu0
    %v952 = vadd.f32 %v486, %v949
    %v953 = vtanh.pop %v952
    %v955 = vsel %vm503, %v953, 0
    %957 = vmatprep.subr.mxu0 0.0
    %958 = vmatpush1.msra.mxu0 0.0
    %959 = vmatprep.subr.mxu0 0.0
    %960 = vmatpush1.msra.mxu0 0.0
    %961 = vmatprep.subr.mxu0 0.0
    %962 = vmatpush1.msra.mxu0 0.0
    %963 = vmatprep.subr.mxu0 0.0
    %964 = vmatpush1.msra.mxu0 0.0
    %965 = vmatprep.subr.mxu0 0.0
    %966 = vmatpush1.msra.mxu0 0.0
    %967 = vmatprep.subr.mxu0 0.0
    %968 = vmatpush1.msra.mxu0 0.0
    %969 = vmatprep.subr.mxu0 0.0
    %970 = vmatpush1.msra.mxu0 0.0
    %971 = vmatprep.subr.mxu0 0.0
    %972 = vmatpush1.msra.mxu0 0.0
    %973 = vmatprep.subr.mxu0 0.0
    %974 = vmatpush1.msra.mxu0 0.0
    %975 = vmatprep.subr.mxu0 0.0
    %976 = vmatpush1.msra.mxu0 0.0
    %977 = vmatprep.subr.mxu0 0.0
    %978 = vmatpush1.msra.mxu0 0.0
    %979 = vmatprep.subr.mxu0 0.0
    %980 = vmatpush1.msra.mxu0 0.0
    %981 = vmatprep.subr.mxu0 0.0
    %982 = vmatpush1.msra.mxu0 %v502
    %983 = vmatprep.subr.mxu0 0.0
    %984 = vmatpush1.msra.mxu0 %v501
    %985 = vmatprep.subr.mxu0 0.0
    %986 = vmatpush1.msra.mxu0 %v500
    %987 = vmatprep.subr.mxu0 0.0
    %988 = vmatpush1.msra.mxu0 %v499
    %989 = vmatprep.subr.mxu0 0.0
    %990 = vmatpush2.msra.mxu0 0.0
    %991 = vmatprep.subr.mxu0 0.0
    %992 = vmatpush2.msra.mxu0 0.0
    %993 = vmatprep.subr.mxu0 0.0
    %994 = vmatpush2.msra.mxu0 0.0
    %995 = vmatprep.subr.mxu0 0.0
    %996 = vmatpush2.msra.mxu0 0.0
    %997 = vmatprep.subr.mxu0 0.0
    %998 = vmatpush2.msra.mxu0 0.0
    %999 = vmatprep.subr.mxu0 0.0
    %1000 = vmatpush2.msra.mxu0 0.0
    %1001 = vmatprep.subr.mxu0 0.0
    %1002 = vmatpush2.msra.mxu0 0.0
    %1003 = vmatprep.subr.mxu0 0.0
    %1004 = vmatpush2.msra.mxu0 0.0
    %1005 = vmatprep.subr.mxu0 0.0
    %1006 = vmatpush2.msra.mxu0 0.0
    %1007 = vmatprep.subr.mxu0 0.0
    %1008 = vmatpush2.msra.mxu0 0.0
    %1009 = vmatprep.subr.mxu0 0.0
    %1010 = vmatpush2.msra.mxu0 0.0
    %1011 = vmatprep.subr.mxu0 0.0
    %1012 = vmatpush2.msra.mxu0 0.0
    %1013 = vmatprep.subr.mxu0 0.0
    %1014 = vmatpush2.msra.mxu0 0.0
    %1015 = vmatprep.subr.mxu0 0.0
    %1016 = vmatpush2.msra.mxu0 0.0
    %1017 = vmatprep.subr.mxu0 0.0
    %1018 = vmatpush2.msra.mxu0 0.0
    %1019 = vmatprep.subr.mxu0 0.0
    %1020 = vmatpush2.msra.mxu0 0.0
    %1021 = vmatprep.mubr.f32.mxu0 0.0
    %1022 = vmatmul.mubr.f32.gmra.mxu0 %v955
    %v1023 = vpop.f32.mrf.mxu0
    %v1024 = vadd.f32 0.0, %v1023
    %v1025 = vpop.f32.mrf.mxu0
    %1026 = vdwg.mxu0
    %v1027 = vadd.f32 %v491, %v1024
    %v1028 = vtanh.pop %v1027
    %v1030 = vsel %vm503, %v1028, 0
    %1032 = vmatprep.subr.mxu0 0.0
    %1033 = vmatpush1.msra.mxu0 0.0
    %1034 = vmatprep.subr.mxu0 0.0
    %1035 = vmatpush1.msra.mxu0 0.0
    %1036 = vmatprep.subr.mxu0 0.0
    %1037 = vmatpush1.msra.mxu0 0.0
    %1038 = vmatprep.subr.mxu0 0.0
    %1039 = vmatpush1.msra.mxu0 0.0
    %1040 = vmatprep.subr.mxu0 0.0
    %1041 = vmatpush1.msra.mxu0 0.0
    %1042 = vmatprep.subr.mxu0 0.0
    %1043 = vmatpush1.msra.mxu0 0.0
    %1044 = vmatprep.subr.mxu0 0.0
    %1045 = vmatpush1.msra.mxu0 0.0
    %1046 = vmatprep.subr.mxu0 0.0
    %1047 = vmatpush1.msra.mxu0 0.0
    %1048 = vmatprep.subr.mxu0 0.0
    %1049 = vmatpush1.msra.mxu0 0.0
    %1050 = vmatprep.subr.mxu0 0.0
    %1051 = vmatpush1.msra.mxu0 0.0
    %1052 = vmatprep.subr.mxu0 0.0
    %1053 = vmatpush1.msra.mxu0 0.0
    %1054 = vmatprep.subr.mxu0 0.0
    %1055 = vmatpush1.msra.mxu0 0.0
    %1056 = vmatprep.subr.mxu0 0.0
    %1057 = vmatpush1.msra.mxu0 %v502
    %1058 = vmatprep.subr.mxu0 0.0
    %1059 = vmatpush1.msra.mxu0 %v501
    %1060 = vmatprep.subr.mxu0 0.0
    %1061 = vmatpush1.msra.mxu0 %v500
    %1062 = vmatprep.subr.mxu0 0.0
    %1063 = vmatpush1.msra.mxu0 %v499
    %1064 = vmatprep.subr.mxu0 0.0
    %1065 = vmatpush2.msra.mxu0 0.0
    %1066 = vmatprep.subr.mxu0 0.0
    %1067 = vmatpush2.msra.mxu0 0.0
    %1068 = vmatprep.subr.mxu0 0.0
    %1069 = vmatpush2.msra.mxu0 0.0
    %1070 = vmatprep.subr.mxu0 0.0
    %1071 = vmatpush2.msra.mxu0 0.0
    %1072 = vmatprep.subr.mxu0 0.0
    %1073 = vmatpush2.msra.mxu0 0.0
    %1074 = vmatprep.subr.mxu0 0.0
    %1075 = vmatpush2.msra.mxu0 0.0
    %1076 = vmatprep.subr.mxu0 0.0
    %1077 = vmatpush2.msra.mxu0 0.0
    %1078 = vmatprep.subr.mxu0 0.0
    %1079 = vmatpush2.msra.mxu0 0.0
    %1080 = vmatprep.subr.mxu0 0.0
    %1081 = vmatpush2.msra.mxu0 0.0
    %1082 = vmatprep.subr.mxu0 0.0
    %1083 = vmatpush2.msra.mxu0 0.0
    %1084 = vmatprep.subr.mxu0 0.0
    %1085 = vmatpush2.msra.mxu0 0.0
    %1086 = vmatprep.subr.mxu0 0.0
    %1087 = vmatpush2.msra.mxu0 0.0
    %1088 = vmatprep.subr.mxu0 0.0
    %1089 = vmatpush2.msra.mxu0 0.0
    %1090 = vmatprep.subr.mxu0 0.0
    %1091 = vmatpush2.msra.mxu0 0.0
    %1092 = vmatprep.subr.mxu0 0.0
    %1093 = vmatpush2.msra.mxu0 0.0
    %1094 = vmatprep.subr.mxu0 0.0
    %1095 = vmatpush2.msra.mxu0 0.0
    %1096 = vmatprep.mubr.f32.mxu0 0.0
    %1097 = vmatmul.mubr.f32.gmra.mxu0 %v1030
    %v1098 = vpop.f32.mrf.mxu0
    %v1099 = vadd.f32 0.0, %v1098
    %v1100 = vpop.f32.mrf.mxu0
    %1101 = vdwg.mxu0
    %v1102 = vadd.f32 %v496, %v1099
    %v1103 = vtanh.pop %v1102
    %v1104 = vld [vmem:[%s4] sm:$0xff]
    %v1105 = vld [vmem:[%s4 + $0x8] sm:$0xff]
    %v1106 = vld [vmem:[%s4 + $0x10] sm:$0xff]
    %v1107 = vld [vmem:[%s4 + $0x18] sm:$0xff]
    %v1108 = vld [vmem:[%s5] sm:$0x1]
    %v1110 = vlaneseq
    %v1111 = vshrl.u32 %v1110, 7
    %v1112 = vsub.s32 0, %v1111
    %v1113 = vrot.slane %v1108, %v1112
    %v1116 = vsel %vm503, %v1103, 0
    %1118 = vmatprep.subr.mxu0 0.0
    %1119 = vmatpush1.msra.mxu0 0.0
    %1120 = vmatprep.subr.mxu0 0.0
    %1121 = vmatpush1.msra.mxu0 0.0
    %1122 = vmatprep.subr.mxu0 0.0
    %1123 = vmatpush1.msra.mxu0 0.0
    %1124 = vmatprep.subr.mxu0 0.0
    %1125 = vmatpush1.msra.mxu0 0.0
    %1126 = vmatprep.subr.mxu0 0.0
    %1127 = vmatpush1.msra.mxu0 0.0
    %1128 = vmatprep.subr.mxu0 0.0
    %1129 = vmatpush1.msra.mxu0 0.0
    %1130 = vmatprep.subr.mxu0 0.0
    %1131 = vmatpush1.msra.mxu0 0.0
    %1132 = vmatprep.subr.mxu0 0.0
    %1133 = vmatpush1.msra.mxu0 0.0
    %1134 = vmatprep.subr.mxu0 0.0
    %1135 = vmatpush1.msra.mxu0 0.0
    %1136 = vmatprep.subr.mxu0 0.0
    %1137 = vmatpush1.msra.mxu0 0.0
    %1138 = vmatprep.subr.mxu0 0.0
    %1139 = vmatpush1.msra.mxu0 0.0
    %1140 = vmatprep.subr.mxu0 0.0
    %1141 = vmatpush1.msra.mxu0 0.0
    %1142 = vmatprep.subr.mxu0 0.0
    %1143 = vmatpush1.msra.mxu0 %v1107
    %1144 = vmatprep.subr.mxu0 0.0
    %1145 = vmatpush1.msra.mxu0 %v1106
    %1146 = vmatprep.subr.mxu0 0.0
    %1147 = vmatpush1.msra.mxu0 %v1105
    %1148 = vmatprep.subr.mxu0 0.0
    %1149 = vmatpush1.msra.mxu0 %v1104
    %1150 = vmatprep.subr.mxu0 0.0
    %1151 = vmatpush2.msra.mxu0 0.0
    %1152 = vmatprep.subr.mxu0 0.0
    %1153 = vmatpush2.msra.mxu0 0.0
    %1154 = vmatprep.subr.mxu0 0.0
    %1155 = vmatpush2.msra.mxu0 0.0
    %1156 = vmatprep.subr.mxu0 0.0
    %1157 = vmatpush2.msra.mxu0 0.0
    %1158 = vmatprep.subr.mxu0 0.0
    %1159 = vmatpush2.msra.mxu0 0.0
    %1160 = vmatprep.subr.mxu0 0.0
    %1161 = vmatpush2.msra.mxu0 0.0
    %1162 = vmatprep.subr.mxu0 0.0
    %1163 = vmatpush2.msra.mxu0 0.0
    %1164 = vmatprep.subr.mxu0 0.0
    %1165 = vmatpush2.msra.mxu0 0.0
    %1166 = vmatprep.subr.mxu0 0.0
    %1167 = vmatpush2.msra.mxu0 0.0
    %1168 = vmatprep.subr.mxu0 0.0
    %1169 = vmatpush2.msra.mxu0 0.0
    %1170 = vmatprep.subr.mxu0 0.0
    %1171 = vmatpush2.msra.mxu0 0.0
    %1172 = vmatprep.subr.mxu0 0.0
    %1173 = vmatpush2.msra.mxu0 0.0
    %1174 = vmatprep.subr.mxu0 0.0
    %1175 = vmatpush2.msra.mxu0 0.0
    %1176 = vmatprep.subr.mxu0 0.0
    %1177 = vmatpush2.msra.mxu0 0.0
    %1178 = vmatprep.subr.mxu0 0.0
    %1179 = vmatpush2.msra.mxu0 0.0
    %1180 = vmatprep.subr.mxu0 0.0
    %1181 = vmatpush2.msra.mxu0 0.0
    %1182 = vmatprep.mubr.f32.mxu0 0.0
    %1183 = vmatmul.mubr.f32.gmra.mxu0 %v1116
    %v1184 = vpop.f32.mrf.mxu0
    %v1185 = vadd.f32 %v1113, %v1184
    %v1186 = vpop.f32.mrf.mxu0
    %1187 = vdwg.mxu0
    %vm1188 = vcmask 123904
    %1189 = vst.msk [vmem:[#allocation5] sm:$0x3] %vm1188, %v1185
    // Predicated region
    $region30: #{tpu_custom_call.1} parent=1 // pred_check
      _
    $region31: #{tpu_custom_call.1} parent=1 // pred_check_branch
      %1191 = sbr.rel (0) target = $region33
    $region32: #{tpu_custom_call.1} parent=1 // pred_region
      %s1193 = ssub.s32 32, 32
      %1194 = vsyncadd [#allocation3], %s1193
      %s1196 = sshll.u32 [#allocation5], 4
      %s1197 = int_to_ptr.vmem [resolvable:$true] %s1196
      %1199 = dma.vmem_to_hbm [thread:$0]  %s1197, 32, %s6, [#allocation3]
    $region33: #{tpu_custom_call.1} parent=1 // pred_fallthru
      _
    // Predicated region
    $region34: #{tpu_custom_call.1} parent=1 // pred_check
      _
    $region35: #{tpu_custom_call.1} parent=1 // pred_check_branch
      %1201 = sbr.rel (0) target = $region37
    $region36: #{tpu_custom_call.1} parent=1 // pred_region
      %1202 = dma.done [#allocation3], 32
    $region37: #{tpu_custom_call.1} parent=1 // pred_fallthru
      _
    %1203 = vsyncpa [#allocation3], 1
    %1204 = vsyncpa [#allocation4], 1

</llo_original>
